<compile_context>
chip_gen: v7x
topology: tpu7x:2x2x1
jax: 0.10.0
libtpu: 0.0.40
codegen_flags: <defaults>
</compile_context>

<pallas_src>
import functools

import jax
import jax.numpy as jnp
from jax.experimental import pallas as pl
from jax.experimental.pallas import tpu as pltpu

_LANES = 128


def _make_kernel(n_valid, block_rows, bias, sev_penalty, positive_penalty):
    inv_n = 1.0 / float(n_valid)

    def kernel(out_ref, tgt_ref, dm_ref, w_ref, res_ref, acc_ref):
        i = pl.program_id(0)
        last = pl.num_programs(0) - 1

        @pl.when(i == 0)
        def _():
            acc_ref[...] = jnp.zeros_like(acc_ref)

        # ---- BCE partial sum over this lane-dense (block_rows, 128) tile ----
        out = out_ref[...]            # probabilities in (0, 1); pads are 0.5
        tgt = tgt_ref[...]            # targets in [0, 1]; pads are 0.0
        # nn.BCELoss clamps each log term at -100.
        log_p = jnp.maximum(jnp.log(out), -100.0)
        log_1mp = jnp.maximum(jnp.log(1.0 - out), -100.0)
        per_elem = -(tgt * log_p + (1.0 - tgt) * log_1mp)

        # Mask padded tail elements out of the sum (divide by true N at the end).
        row = jax.lax.broadcasted_iota(jnp.int32, (block_rows, _LANES), 0)
        lane = jax.lax.broadcasted_iota(jnp.int32, (block_rows, _LANES), 1)
        gidx = (i * block_rows + row) * _LANES + lane
        masked = jnp.where(gidx < n_valid, per_elem, 0.0)
        acc_ref[...] += jnp.sum(masked, keepdims=True)

        # ---- finalize: SEV loss, positive loss, pack results ----
        @pl.when(i == last)
        def _():
            bce = acc_ref[...] * inv_n                     # (1, 1)

            dm = dm_ref[...]                               # (1, D)
            w = w_ref[...]                                 # (1, D) linear.weight
            # linear(data_mean.view(1,-1)) -> (1,1); keep on VPU/XLU (no MXU).
            z = jnp.sum(dm * w, keepdims=True) + bias      # (1, 1)

            # SEV: sev_penalty * mean(log(clamp(|z / w|, 1e-10)))
            edge = jnp.maximum(jnp.abs(z / w), 1e-10)      # (1, D)
            sev = sev_penalty * jnp.mean(jnp.log(edge), keepdims=True)   # (1, 1)

            # BaselinePositiveLoss: positive_penalty * clamp(sigmoid(z)-0.5, min=-0.05)
            prob = 1.0 / (1.0 + jnp.exp(-z))
            pos = positive_penalty * jnp.maximum(prob - 0.5, -0.05)      # (1, 1)

            total = bce + sev + pos                        # (1, 1)

            out_lane = jax.lax.broadcasted_iota(jnp.int32, (1, _LANES), 1)
            res_ref[...] = (jnp.where(out_lane == 0, bce, 0.0)
                            + jnp.where(out_lane == 1, total, 0.0)
                            + jnp.where(out_lane == 2, sev, 0.0))

    return kernel


def vol_opt_forward(output, target, data_mean, weight, bias,
                    sev_penalty, positive_penalty, *, max_block_rows=256):
    """Returns (bce_loss, total_loss[1,1], sev_loss) exactly like VolOpt.forward.

    `x` from the PyTorch signature is unused by the math (SEV_Loss ignores it),
    so it is not passed to the kernel.
    """
    n = int(output.shape[0])
    d = int(data_mean.shape[-1])

    # Lane-dense layout: flatten (N,1) -> (padded_rows, 128).
    rows = -(-n // _LANES)
    rows8 = -(-rows // 8) * 8                       # sublane multiple
    block_rows = min(int(max_block_rows), rows8)
    padded_rows = -(-rows8 // block_rows) * block_rows
    padded_n = padded_rows * _LANES
    pad = padded_n - n

    out2d = jnp.pad(output.reshape(-1).astype(jnp.float32), (0, pad),
                    constant_values=0.5).reshape(padded_rows, _LANES)
    tgt2d = jnp.pad(target.reshape(-1).astype(jnp.float32), (0, pad),
                    constant_values=0.0).reshape(padded_rows, _LANES)
    dm = data_mean.reshape(1, d).astype(jnp.float32)
    w = weight.reshape(1, d).astype(jnp.float32)

    grid = (padded_rows // block_rows,)
    kernel = _make_kernel(n, block_rows, float(bias),
                          float(sev_penalty), float(positive_penalty))

    res = pl.pallas_call(
        kernel,
        out_shape=jax.ShapeDtypeStruct((1, _LANES), jnp.float32),
        grid_spec=pltpu.PrefetchScalarGridSpec(
            num_scalar_prefetch=0,
            grid=grid,
            in_specs=[
                pl.BlockSpec((block_rows, _LANES), lambda i: (i, 0)),  # output
                pl.BlockSpec((block_rows, _LANES), lambda i: (i, 0)),  # target
                pl.BlockSpec((1, d), lambda i: (0, 0)),                # data_mean
                pl.BlockSpec((1, d), lambda i: (0, 0)),                # weight
            ],
            out_specs=pl.BlockSpec((1, _LANES), lambda i: (0, 0)),
            scratch_shapes=[pltpu.VMEM((1, 1), jnp.float32)],          # BCE sum
        ),
        compiler_params=pltpu.CompilerParams(
            dimension_semantics=("arbitrary",)),                       # reduction axis
    )(out2d, tgt2d, dm, w)

    bce = res[0, 0]
    total = res[0, 1].reshape(1, 1)   # matches PyTorch (1,1) broadcast shape
    sev = res[0, 2]
    return bce, total, sev


def _reference(output, target, data_mean, weight, bias, sev_penalty, positive_penalty):
    # pure-JAX reference of the PyTorch semantics
    log_p = jnp.maximum(jnp.log(output), -100.0)
    log_1mp = jnp.maximum(jnp.log(1.0 - output), -100.0)
    bce = jnp.mean(-(target * log_p + (1.0 - target) * log_1mp))
    z = data_mean @ weight.T + bias                       # (1,1)
    edge = jnp.maximum(jnp.abs(z / weight), 1e-10)        # (1,D)
    sev = sev_penalty * jnp.mean(jnp.log(edge))
    pos = positive_penalty * jnp.maximum(jax.nn.sigmoid(z) - 0.5, -0.05)  # (1,1)
    return bce, bce + sev + pos, sev


def _run_case(key, n, d, bias, sev_penalty, positive_penalty):
    k1, k2, k3, k4, k5 = jax.random.split(key, 5)
    output = jax.nn.sigmoid(jax.random.normal(k1, (n, 1), jnp.float32))
    target = jax.random.bernoulli(k2, 0.5, (n, 1)).astype(jnp.float32)
    data_mean = jax.random.normal(k3, (1, d), jnp.float32)
    weight = 0.1 * jax.random.normal(k4, (1, d), jnp.float32) + 0.05
    # x is part of the PyTorch forward signature but unused by the computation.
    _x = jax.random.normal(k5, (n, d), jnp.float32)

    loss, total, sev = vol_opt_forward(
        output, target, data_mean, weight, bias, sev_penalty, positive_penalty)
    jax.block_until_ready((loss, total, sev))

    ref_loss, ref_total, ref_sev = _reference(
        output, target, data_mean, weight, bias, sev_penalty, positive_penalty)

    assert jnp.allclose(loss, ref_loss, rtol=1e-5, atol=1e-5)
    assert jnp.allclose(total, ref_total, rtol=1e-5, atol=1e-5)
    assert jnp.allclose(sev, ref_sev, rtol=1e-5, atol=1e-5)
    assert total.shape == (1, 1)


if __name__ == "__main__":
    key = jax.random.PRNGKey(0)
    k_small, k_grid = jax.random.split(key)

    # Small case (matches the module's typical tiny batch): exercises padding + masking.
    _run_case(k_small, n=8, d=32, bias=0.05, sev_penalty=0.1, positive_penalty=1.0)

    # Larger case: exercises the multi-step batch grid / accumulator path.
    _run_case(k_grid, n=33000, d=32, bias=-0.02, sev_penalty=0.25, positive_penalty=0.5)

    print("KERNEL_OK")
</pallas_src>

<mosaic_0001>
module attributes {stable_mosaic.version = 11 : i64} {
  func.func @kernel(%arg0: i32, %arg1: memref<8x128xf32, #tpu.memory_space<vmem>>, %arg2: memref<8x128xf32, #tpu.memory_space<vmem>>, %arg3: memref<1x32xf32, #tpu.memory_space<vmem>>, %arg4: memref<1x32xf32, #tpu.memory_space<vmem>>, %arg5: memref<1x128xf32, #tpu.memory_space<vmem>>, %arg6: memref<1x1xf32, #tpu.memory_space<vmem>>) attributes {dimension_semantics = [#tpu.dimension_semantics<arbitrary>], iteration_bounds = array<i64: 1>, scalar_prefetch = 0 : i64, scratch_operands = 1 : i64, tpu.core_type = #tpu.core_type<tc>, window_params = [{transform_indices = @transform_0, window_bounds = array<i64: 8, 128>}, {transform_indices = @transform_1, window_bounds = array<i64: 8, 128>}, {pipeline_mode = #tpu.pipeline_mode<synchronous>, transform_indices = @transform_2, window_bounds = array<i64: 1, 32>}, {pipeline_mode = #tpu.pipeline_mode<synchronous>, transform_indices = @transform_3, window_bounds = array<i64: 1, 32>}, {pipeline_mode = #tpu.pipeline_mode<synchronous>, transform_indices = @transform_4, window_bounds = array<i64: 1, 128>}]} {
    %c0_i32 = arith.constant 0 : i32
    %0 = arith.cmpi eq, %arg0, %c0_i32 : i32
    %1 = arith.extui %0 : i1 to i32
    %c0_i32_0 = arith.constant 0 : i32
    %2 = arith.cmpi ne, %1, %c0_i32_0 : i32
    scf.if %2 {
      %cst_17 = arith.constant 0.000000e+00 : f32
      %43 = vector.broadcast %cst_17 : f32 to vector<1x1xf32>
      %c0_18 = arith.constant 0 : index
      %c0_19 = arith.constant 0 : index
      %44 = vector.load %arg6[%c0_18, %c0_19] : memref<1x1xf32, #tpu.memory_space<vmem>>, vector<1x1xf32>
      tpu.vector_store %arg6[%c0_18, %c0_19], %43 {strides = array<i32>} : memref<1x1xf32, #tpu.memory_space<vmem>>, vector<1x1xf32>,
    } else {
    }
    %c0 = arith.constant 0 : index
    %c0_1 = arith.constant 0 : index
    %3 = vector.load %arg1[%c0, %c0_1] : memref<8x128xf32, #tpu.memory_space<vmem>>, vector<8x128xf32>
    %c0_2 = arith.constant 0 : index
    %c0_3 = arith.constant 0 : index
    %4 = vector.load %arg2[%c0_2, %c0_3] : memref<8x128xf32, #tpu.memory_space<vmem>>, vector<8x128xf32>
    %5 = math.log %3 : vector<8x128xf32>
    %cst = arith.constant -1.000000e+02 : f32
    %6 = vector.broadcast %cst : f32 to vector<8x128xf32>
    %7 = arith.maximumf %5, %6 : vector<8x128xf32>
    %cst_4 = arith.constant 1.000000e+00 : f32
    %8 = vector.broadcast %cst_4 : f32 to vector<8x128xf32>
    %9 = arith.subf %8, %3 : vector<8x128xf32>
    %10 = math.log %9 : vector<8x128xf32>
    %cst_5 = arith.constant -1.000000e+02 : f32
    %11 = vector.broadcast %cst_5 : f32 to vector<8x128xf32>
    %12 = arith.maximumf %10, %11 : vector<8x128xf32>
    %13 = arith.mulf %4, %7 : vector<8x128xf32>
    %cst_6 = arith.constant 1.000000e+00 : f32
    %14 = vector.broadcast %cst_6 : f32 to vector<8x128xf32>
    %15 = arith.subf %14, %4 : vector<8x128xf32>
    %16 = arith.mulf %15, %12 : vector<8x128xf32>
    %17 = arith.addf %13, %16 : vector<8x128xf32>
    %cst_7 = arith.constant 0.000000e+00 : f32
    %18 = vector.broadcast %cst_7 : f32 to vector<8x128xf32>
    %19 = arith.subf %18, %17 : vector<8x128xf32>
    %20 = tpu.iota {dimensions = array<i32: 0>} : vector<8x128xi32>
    %21 = tpu.iota {dimensions = array<i32: 1>} : vector<8x128xi32>
    %c8_i32 = arith.constant 8 : i32
    %22 = arith.muli %arg0, %c8_i32 : i32
    %23 = vector.broadcast %22 : i32 to vector<8x128xi32>
    %24 = arith.addi %23, %20 : vector<8x128xi32>
    %c128_i32 = arith.constant 128 : i32
    %25 = vector.broadcast %c128_i32 : i32 to vector<8x128xi32>
    %26 = arith.muli %24, %25 : vector<8x128xi32>
    %27 = arith.addi %26, %21 : vector<8x128xi32>
    %c8_i32_8 = arith.constant 8 : i32
    %28 = vector.broadcast %c8_i32_8 : i32 to vector<8x128xi32>
    %29 = arith.cmpi slt, %27, %28 : vector<8x128xi32>
    %cst_9 = arith.constant 0.000000e+00 : f32
    %30 = vector.broadcast %cst_9 : f32 to vector<8x128xf32>
    %31 = arith.select %29, %19, %30 : vector<8x128xi1>, vector<8x128xf32>
    %c0_10 = arith.constant 0 : index
    %c0_11 = arith.constant 0 : index
    %32 = vector.load %arg6[%c0_10, %c0_11] : memref<1x1xf32, #tpu.memory_space<vmem>>, vector<1x1xf32>
    %33 = vector.shape_cast %31 : vector<8x128xf32> to vector<1x8x128xf32>
    %cst_12 = arith.constant dense<0.000000e+00> : vector<1xf32>
    %34 = vector.multi_reduction <add>, %33, %cst_12 [1, 2] : vector<1x8x128xf32> to vector<1xf32>
    %35 = vector.shape_cast %34 : vector<1xf32> to vector<1x1x1xf32>
    %36 = vector.extract %35[0, 0, 0] : f32 from vector<1x1x1xf32>
    %37 = vector.broadcast %36 : f32 to vector<1x1xf32>
    %38 = arith.addf %32, %37 : vector<1x1xf32>
    %c0_13 = arith.constant 0 : index
    %c0_14 = arith.constant 0 : index
    %39 = vector.load %arg6[%c0_13, %c0_14] : memref<1x1xf32, #tpu.memory_space<vmem>>, vector<1x1xf32>
    tpu.vector_store %arg6[%c0_13, %c0_14], %38 {strides = array<i32>} : memref<1x1xf32, #tpu.memory_space<vmem>>, vector<1x1xf32>,
    %c0_i32_15 = arith.constant 0 : i32
    %40 = arith.cmpi eq, %arg0, %c0_i32_15 : i32
    %41 = arith.extui %40 : i1 to i32
    %c0_i32_16 = arith.constant 0 : i32
    %42 = arith.cmpi ne, %41, %c0_i32_16 : i32
    scf.if %42 {
      %c0_17 = arith.constant 0 : index
      %c0_18 = arith.constant 0 : index
      %43 = vector.load %arg6[%c0_17, %c0_18] : memref<1x1xf32, #tpu.memory_space<vmem>>, vector<1x1xf32>
      %cst_19 = arith.constant 1.250000e-01 : f32
      %44 = vector.broadcast %cst_19 : f32 to vector<1x1xf32>
      %45 = arith.mulf %43, %44 : vector<1x1xf32>
      %c0_20 = arith.constant 0 : index
      %c0_21 = arith.constant 0 : index
      %46 = vector.load %arg3[%c0_20, %c0_21] : memref<1x32xf32, #tpu.memory_space<vmem>>, vector<1x32xf32>
      %c0_22 = arith.constant 0 : index
      %c0_23 = arith.constant 0 : index
      %47 = vector.load %arg4[%c0_22, %c0_23] : memref<1x32xf32, #tpu.memory_space<vmem>>, vector<1x32xf32>
      %48 = arith.mulf %46, %47 : vector<1x32xf32>
      %49 = vector.shape_cast %48 : vector<1x32xf32> to vector<1x1x32xf32>
      %cst_24 = arith.constant dense<0.000000e+00> : vector<1xf32>
      %50 = vector.multi_reduction <add>, %49, %cst_24 [1, 2] : vector<1x1x32xf32> to vector<1xf32>
      %51 = vector.shape_cast %50 : vector<1xf32> to vector<1x1x1xf32>
      %52 = vector.extract %51[0, 0, 0] : f32 from vector<1x1x1xf32>
      %53 = vector.broadcast %52 : f32 to vector<1x1xf32>
      %cst_25 = arith.constant 5.000000e-02 : f32
      %54 = vector.broadcast %cst_25 : f32 to vector<1x1xf32>
      %55 = arith.addf %53, %54 : vector<1x1xf32>
      %56 = vector.broadcast %55 : vector<1x1xf32> to vector<1x32xf32>
      %57 = arith.divf %56, %47 : vector<1x32xf32>
      %58 = math.absf %57 : vector<1x32xf32>
      %cst_26 = arith.constant 1.000000e-10 : f32
      %59 = vector.broadcast %cst_26 : f32 to vector<1x32xf32>
      %60 = arith.maximumf %58, %59 : vector<1x32xf32>
      %61 = math.log %60 : vector<1x32xf32>
      %62 = vector.shape_cast %61 : vector<1x32xf32> to vector<1x1x32xf32>
      %cst_27 = arith.constant dense<0.000000e+00> : vector<1xf32>
      %63 = vector.multi_reduction <add>, %62, %cst_27 [1, 2] : vector<1x1x32xf32> to vector<1xf32>
      %64 = vector.shape_cast %63 : vector<1xf32> to vector<1x1x1xf32>
      %65 = vector.extract %64[0, 0, 0] : f32 from vector<1x1x1xf32>
      %66 = vector.broadcast %65 : f32 to vector<1x1xf32>
      %cst_28 = arith.constant 3.200000e+01 : f32
      %67 = vector.broadcast %cst_28 : f32 to vector<1x1xf32>
      %68 = arith.divf %66, %67 : vector<1x1xf32>
      %cst_29 = arith.constant 1.000000e-01 : f32
      %69 = vector.broadcast %cst_29 : f32 to vector<1x1xf32>
      %70 = arith.mulf %69, %68 : vector<1x1xf32>
      %cst_30 = arith.constant 0.000000e+00 : f32
      %71 = vector.broadcast %cst_30 : f32 to vector<1x1xf32>
      %72 = arith.subf %71, %55 : vector<1x1xf32>
      %73 = math.exp %72 : vector<1x1xf32>
      %cst_31 = arith.constant 1.000000e+00 : f32
      %74 = vector.broadcast %cst_31 : f32 to vector<1x1xf32>
      %75 = arith.addf %74, %73 : vector<1x1xf32>
      %cst_32 = arith.constant 1.000000e+00 : f32
      %76 = vector.broadcast %cst_32 : f32 to vector<1x1xf32>
      %77 = arith.divf %76, %75 : vector<1x1xf32>
      %cst_33 = arith.constant 5.000000e-01 : f32
      %78 = vector.broadcast %cst_33 : f32 to vector<1x1xf32>
      %79 = arith.subf %77, %78 : vector<1x1xf32>
      %cst_34 = arith.constant -5.000000e-02 : f32
      %80 = vector.broadcast %cst_34 : f32 to vector<1x1xf32>
      %81 = arith.maximumf %79, %80 : vector<1x1xf32>
      %cst_35 = arith.constant 1.000000e+00 : f32
      %82 = vector.broadcast %cst_35 : f32 to vector<1x1xf32>
      %83 = arith.mulf %82, %81 : vector<1x1xf32>
      %84 = arith.addf %45, %70 : vector<1x1xf32>
      %85 = arith.addf %84, %83 : vector<1x1xf32>
      %86 = tpu.iota {dimensions = array<i32: 1>} : vector<1x128xi32>
      %c0_i32_36 = arith.constant 0 : i32
      %87 = vector.broadcast %c0_i32_36 : i32 to vector<1x128xi32>
      %88 = arith.cmpi eq, %86, %87 : vector<1x128xi32>
      %cst_37 = arith.constant 0.000000e+00 : f32
      %89 = vector.shape_cast %45 : vector<1x1xf32> to vector<1x1xf32>
      %90 = vector.broadcast %89 : vector<1x1xf32> to vector<1x128xf32>
      %91 = vector.broadcast %cst_37 : f32 to vector<1x128xf32>
      %92 = arith.select %88, %90, %91 : vector<1x128xi1>, vector<1x128xf32>
      %c1_i32 = arith.constant 1 : i32
      %93 = vector.broadcast %c1_i32 : i32 to vector<1x128xi32>
      %94 = arith.cmpi eq, %86, %93 : vector<1x128xi32>
      %cst_38 = arith.constant 0.000000e+00 : f32
      %95 = vector.shape_cast %85 : vector<1x1xf32> to vector<1x1xf32>
      %96 = vector.broadcast %95 : vector<1x1xf32> to vector<1x128xf32>
      %97 = vector.broadcast %cst_38 : f32 to vector<1x128xf32>
      %98 = arith.select %94, %96, %97 : vector<1x128xi1>, vector<1x128xf32>
      %99 = arith.addf %92, %98 : vector<1x128xf32>
      %c2_i32 = arith.constant 2 : i32
      %100 = vector.broadcast %c2_i32 : i32 to vector<1x128xi32>
      %101 = arith.cmpi eq, %86, %100 : vector<1x128xi32>
      %cst_39 = arith.constant 0.000000e+00 : f32
      %102 = vector.shape_cast %70 : vector<1x1xf32> to vector<1x1xf32>
      %103 = vector.broadcast %102 : vector<1x1xf32> to vector<1x128xf32>
      %104 = vector.broadcast %cst_39 : f32 to vector<1x128xf32>
      %105 = arith.select %101, %103, %104 : vector<1x128xi1>, vector<1x128xf32>
      %106 = arith.addf %99, %105 : vector<1x128xf32>
      %c0_40 = arith.constant 0 : index
      %c0_41 = arith.constant 0 : index
      %107 = vector.load %arg5[%c0_40, %c0_41] : memref<1x128xf32, #tpu.memory_space<vmem>>, vector<1x128xf32>
      tpu.vector_store %arg5[%c0_40, %c0_41], %106 {strides = array<i32>} : memref<1x128xf32, #tpu.memory_space<vmem>>, vector<1x128xf32>,
    } else {
    }
    return
  }
  func.func @transform_0(%arg0: i32) -> (i32, i32) {
    %c0_i32 = arith.constant 0 : i32
    %c0_i32_0 = arith.constant 0 : i32
    return %arg0, %c0_i32 : i32, i32
  }
  func.func @transform_1(%arg0: i32) -> (i32, i32) {
    %c0_i32 = arith.constant 0 : i32
    %c0_i32_0 = arith.constant 0 : i32
    return %arg0, %c0_i32 : i32, i32
  }
  func.func @transform_2(%arg0: i32) -> (i32, i32) {
    %c0_i32 = arith.constant 0 : i32
    %c0_i32_0 = arith.constant 0 : i32
    %c0_i32_1 = arith.constant 0 : i32
    return %c0_i32, %c0_i32_0 : i32, i32
  }
  func.func @transform_3(%arg0: i32) -> (i32, i32) {
    %c0_i32 = arith.constant 0 : i32
    %c0_i32_0 = arith.constant 0 : i32
    %c0_i32_1 = arith.constant 0 : i32
    return %c0_i32, %c0_i32_0 : i32, i32
  }
  func.func @transform_4(%arg0: i32) -> (i32, i32) {
    %c0_i32 = arith.constant 0 : i32
    %c0_i32_0 = arith.constant 0 : i32
    %c0_i32_1 = arith.constant 0 : i32
    return %c0_i32, %c0_i32_0 : i32, i32
  }
}

</mosaic_0001>

<llo_original>
// kernel: tpu_custom_call.1
$region0: #{tpu_custom_call.1}
  #allocation0 [shape = 'u32[]', space=smem, size = 0x4, offset = 0x4, fixed_abs, tag = 'smem constant byte address 0x4 - core index']
  #allocation1 [shape = 'u32[144,128]{1,0:T(1,128)}', space=vmem, size = 0x12000, scoped, tag = 'internal scratch']
  #allocation2 [shape = 'f32[1,1]{1,0:T(1,128)}', space=vmem, size = 0x200, scoped, tag = 'scratch operand']
  %s0 = inlined_call_operand.hbm [shape: f32[8,128], index: 0, kind: input, shape index: {}]
  %s1 = inlined_call_operand.hbm [shape: f32[8,128], index: 1, kind: input, shape index: {}]
  %s2 = inlined_call_operand.vmem [shape: f32[1,32], index: 2, kind: input, shape index: {}]
  %s3 = inlined_call_operand.vmem [shape: f32[1,32], index: 3, kind: input, shape index: {}]
  %s4 = inlined_call_operand.hbm [shape: f32[1,128], index: 4, kind: output, shape index: {}]
  %s5 = sld [smem:[#allocation0]]
  $region42: #{tpu_custom_call.1} parent=0
    _
  %s7 = ssub.s32 1, %s5
  %s8 = scalar_select 0, %s7, %s5
  $region1: #{tpu_custom_call.1} parent=0
    #allocation3 [shape = 'u8[4096]{0}', space=vmem, size = 0x1000, scoped, tag = 'input window, operand 0, single buffered']
    #allocation4 [shape = 's32[1]{0}', space=sflag, size = 0x4, scoped, tag = 'scoped memory for tpu_custom_call.1']
    #allocation5 [shape = 's32[1]{0}', space=sflag, size = 0x4, scoped, tag = 'scoped memory for tpu_custom_call.1']
    #allocation6 [shape = 'u8[4096]{0}', space=vmem, size = 0x1000, scoped, tag = 'input window, operand 1, single buffered']
    #allocation7 [shape = 's32[1]{0}', space=sflag, size = 0x4, scoped, tag = 'scoped memory for tpu_custom_call.1']
    #allocation8 [shape = 'u8[512]{0}', space=vmem, size = 0x400, scoped, tag = 'output window, operand 0, single buffered']
    %9 = vsyncpa [#allocation4], 0
    %10 = vsyncpa [#allocation7], 0
    %11 = vsyncpa [#allocation5], 0
    // Predicated region
    $region2: #{tpu_custom_call.1} parent=1 // pred_check
      _
    $region3: #{tpu_custom_call.1} parent=1 // pred_check_branch
      %13 = sbr.rel (0) target = $region5
    $region4: #{tpu_custom_call.1} parent=1 // pred_region
      %s15 = ssub.s32 128, 128
      %16 = vsyncadd [#allocation4], %s15
      %s18 = sshll.u32 [#allocation3], 4
      %s19 = int_to_ptr.vmem [resolvable:$true] %s18
      %21 = dma.hbm_to_vmem [thread:$0]  %s0, 128, %s19, [#allocation4]
    $region5: #{tpu_custom_call.1} parent=1 // pred_fallthru
      _
    // Predicated region
    $region6: #{tpu_custom_call.1} parent=1 // pred_check
      _
    $region7: #{tpu_custom_call.1} parent=1 // pred_check_branch
      %23 = sbr.rel (0) target = $region9
    $region8: #{tpu_custom_call.1} parent=1 // pred_region
      %s25 = ssub.s32 128, 128
      %26 = vsyncadd [#allocation7], %s25
      %s28 = sshll.u32 [#allocation6], 4
      %s29 = int_to_ptr.vmem [resolvable:$true] %s28
      %31 = dma.hbm_to_vmem [thread:$0]  %s1, 128, %s29, [#allocation7]
    $region9: #{tpu_custom_call.1} parent=1 // pred_fallthru
      _
    // Predicated region
    $region10: #{tpu_custom_call.1} parent=1 // pred_check
      _
    $region11: #{tpu_custom_call.1} parent=1 // pred_check_branch
      %33 = sbr.rel (0) target = $region13
    $region12: #{tpu_custom_call.1} parent=1 // pred_region
      _
    $region13: #{tpu_custom_call.1} parent=1 // pred_fallthru
      _
    // Predicated region
    $region14: #{tpu_custom_call.1} parent=1 // pred_check
      _
    $region15: #{tpu_custom_call.1} parent=1 // pred_check_branch
      %35 = sbr.rel (0) target = $region17
    $region16: #{tpu_custom_call.1} parent=1 // pred_region
      _
    $region17: #{tpu_custom_call.1} parent=1 // pred_fallthru
      _
    // Predicated region
    $region18: #{tpu_custom_call.1} parent=1 // pred_check
      _
    $region19: #{tpu_custom_call.1} parent=1 // pred_check_branch
      %37 = sbr.rel (0) target = $region21
    $region20: #{tpu_custom_call.1} parent=1 // pred_region
      %38 = dma.done [#allocation4], 128
    $region21: #{tpu_custom_call.1} parent=1 // pred_fallthru
      _
    // Predicated region
    $region22: #{tpu_custom_call.1} parent=1 // pred_check
      _
    $region23: #{tpu_custom_call.1} parent=1 // pred_check_branch
      %40 = sbr.rel (0) target = $region25
    $region24: #{tpu_custom_call.1} parent=1 // pred_region
      %41 = dma.done [#allocation7], 128
    $region25: #{tpu_custom_call.1} parent=1 // pred_fallthru
      _
    %p42 = scmp.eq.s32.totalorder 0, 0
    // Predicated region
    $region26: #{tpu_custom_call.1} parent=1 // pred_check
      %p43 = pneg %p42
    $region27: #{tpu_custom_call.1} parent=1 // pred_check_branch
      %45 = sbr.rel (%p43) target = $region29
    $region28: #{tpu_custom_call.1} parent=1 // pred_region
      %vm46 = vcmask 0
      %47 = vst.msk [vmem:[#allocation2] sm:$0x1] %vm46, 0.0
    $region29: #{tpu_custom_call.1} parent=1 // pred_fallthru
      _
    %v48 = vld [vmem:[#allocation3] sm:$0xff]
    %v49 = vld [vmem:[#allocation6] sm:$0xff]
    %v50 = vlog2.pop %v48
    %v51 = vmul.f32 %v50, 0.6931472
    %v52 = vmax.f32 %v51, -100.0
    %v53 = vsub.f32 1.0, %v48
    %v54 = vlog2.pop %v53
    %v55 = vmul.f32 %v54, 0.6931472
    %v56 = vmax.f32 %v55, -100.0
    %v57 = vmul.f32 %v49, %v52
    %v58 = vsub.f32 1.0, %v49
    %v59 = vmul.f32 %v58, %v56
    %v60 = vadd.f32 %v57, %v59
    %v61 = vsub.f32 0.0, %v60
    %v62 = vlaneseq
    %v63 = vshrl.u32 %v62, 7
    %v64 = vlaneseq
    %v65 = vand.u32 %v64, 127
    %s66 = smul.u32 0, 8
    %v67 = vstv %s66
    %v68 = vadd.s32 %v67, %v63
    %v69 = vmul.u32 %v68, 128
    %v70 = vadd.s32 %v69, %v65
    %vm71 = vcmp.lt.s32.totalorder %v70, 8
    %v72 = vsel %vm71, %v61, 0.0
    %v73 = vld [vmem:[#allocation2] sm:$0x1]
    %74 = vadd.xlane.f32.xlu0 %v72
    %v75 = vpop.xlane.xlu0 %74
    %v76 = vrot.slane %v75, 4
    %v77 = vadd.f32 %v75, %v76
    %v78 = vrot.slane %v77, 2
    %v79 = vadd.f32 %v77, %v78
    %v80 = vrot.slane %v79, 1
    %v81 = vadd.f32 %v79, %v80
    %s82 = vtos %v81
    %v83 = vstv %s82
    %v84 = vadd.f32 %v73, %v83
    %vm85 = vcmask 0
    %86 = vst.msk [vmem:[#allocation2] sm:$0x1] %vm85, %v84
    // Predicated region
    $region30: #{tpu_custom_call.1} parent=1 // pred_check
      %p87 = pneg %p42
    $region31: #{tpu_custom_call.1} parent=1 // pred_check_branch
      %89 = sbr.rel (%p87) target = $region33
    $region32: #{tpu_custom_call.1} parent=1 // pred_region
      %v90 = vld [vmem:[#allocation2] sm:$0x1]
      %v91 = vmul.f32 %v90, 0.125
      %v92 = vld [vmem:[%s2] sm:$0x1]
      %v93 = vld [vmem:[%s3] sm:$0x1]
      %v94 = vmul.f32 %v92, %v93
      %vm95 = vcmask 253952
      %v96 = vsel %vm95, %v94, 0.0
      %97 = vadd.xlane.f32.xlu0 %v96
      %v98 = vpop.xlane.xlu0 %97
      %v99 = vrot.slane %v98, 4
      %v100 = vadd.f32 %v98, %v99
      %v101 = vrot.slane %v100, 2
      %v102 = vadd.f32 %v100, %v101
      %v103 = vrot.slane %v102, 1
      %v104 = vadd.f32 %v102, %v103
      %s105 = vtos %v104
      %v106 = vstv %s105
      %v107 = vadd.f32 %v106, 0.05
      %v108 = vrcp.pop %v93
      %v109 = vmul.f32 %v107, %v108
      %v110 = vand.u32 2147483647, %v109
      %v111 = vmax.f32 %v110, 1e-10
      %v112 = vlog2.pop %v111
      %v113 = vmul.f32 %v112, 0.6931472
      %v114 = vsel %vm95, %v113, 0.0
      %115 = vadd.xlane.f32.xlu0 %v114
      %v116 = vpop.xlane.xlu0 %115
      %v117 = vrot.slane %v116, 4
      %v118 = vadd.f32 %v116, %v117
      %v119 = vrot.slane %v118, 2
      %v120 = vadd.f32 %v118, %v119
      %v121 = vrot.slane %v120, 1
      %v122 = vadd.f32 %v120, %v121
      %s123 = vtos %v122
      %v124 = vstv %s123
      %v125 = vrcp.pop 32.0
      %v126 = vmul.f32 %v124, %v125
      %v127 = vmul.f32 %v126, 0.1
      %v128 = vsub.f32 0.0, %v107
      %v129 = vmul.f32 %v128, 1.442695
      %v130 = vpow.pop %v129
      %v131 = vadd.f32 %v130, 1.0
      %v132 = vrcp.pop %v131
      %v133 = vmul.f32 1.0, %v132
      %v134 = vsub.f32 %v133, 0.5
      %v135 = vmax.f32 %v134, -0.05
      %v136 = vadd.f32 %v91, %v127
      %v137 = vadd.f32 %v136, %v135
      %vm138 = vcmp.eq.s32.totalorder %v65, 0
      %140 = vset.pattern.permute.xlu0 0
      %141 = vperm.xlu0 %140, %v91
      %v142 = vpop.permute.xlu0 %141
      %v144 = vlaneseq
      %v145 = vshrl.u32 %v144, 7
      %v146 = vsub.s32 0, %v145
      %v147 = vrot.slane %v142, %v146
      %v148 = vsel %vm138, %v147, 0.0
      %vm149 = vcmp.eq.s32.totalorder %v65, 1
      %151 = vset.pattern.permute.xlu0 0
      %152 = vperm.xlu0 %151, %v137
      %v153 = vpop.permute.xlu0 %152
      %v155 = vlaneseq
      %v156 = vshrl.u32 %v155, 7
      %v157 = vsub.s32 0, %v156
      %v158 = vrot.slane %v153, %v157
      %v159 = vsel %vm149, %v158, 0.0
      %v160 = vadd.f32 %v148, %v159
      %vm161 = vcmp.eq.s32.totalorder %v65, 2
      %v162 = vsel %vm161, %v127, 0.0
      %v163 = vadd.f32 %v160, %v162
      %164 = vst [vmem:[#allocation8] sm:$0x1] %v163
    $region33: #{tpu_custom_call.1} parent=1 // pred_fallthru
      _
    // Predicated region
    $region34: #{tpu_custom_call.1} parent=1 // pred_check
      _
    $region35: #{tpu_custom_call.1} parent=1 // pred_check_branch
      %166 = sbr.rel (0) target = $region37
    $region36: #{tpu_custom_call.1} parent=1 // pred_region
      %s168 = ssub.s32 16, 16
      %169 = vsyncadd [#allocation5], %s168
      %s171 = sshll.u32 [#allocation8], 4
      %s172 = int_to_ptr.vmem [resolvable:$true] %s171
      %174 = dma.vmem_to_hbm [thread:$0]  %s172, 16, %s4, [#allocation5]
    $region37: #{tpu_custom_call.1} parent=1 // pred_fallthru
      _
    // Predicated region
    $region38: #{tpu_custom_call.1} parent=1 // pred_check
      _
    $region39: #{tpu_custom_call.1} parent=1 // pred_check_branch
      %176 = sbr.rel (0) target = $region41
    $region40: #{tpu_custom_call.1} parent=1 // pred_region
      %177 = dma.done [#allocation5], 16
    $region41: #{tpu_custom_call.1} parent=1 // pred_fallthru
      _
    %178 = vsyncpa [#allocation4], 1
    %179 = vsyncpa [#allocation7], 1
    %180 = vsyncpa [#allocation5], 1

</llo_original>
